<compile_context>
chip_gen: v7x
topology: tpu7x:2x2x1
jax: 0.10.0
libtpu: 0.0.40
codegen_flags: <defaults>
</compile_context>

<pallas_src>
import functools
import random

import jax
import jax.numpy as jnp
import numpy as np
from jax.experimental import pallas as pl
from jax.experimental.pallas import tpu as pltpu


def _create_disk_kernel(radius: int) -> np.ndarray:
    """Same math as DiskBlur._create_disk_kernel (deterministic from radius)."""
    ksize = 2 * radius + 1
    center = radius
    y, x = np.meshgrid(np.arange(ksize), np.arange(ksize), indexing="ij")
    distance = np.sqrt((x - center) ** 2 + (y - center) ** 2)
    kernel = np.zeros((ksize, ksize), dtype=np.float32)
    kernel[distance <= radius] = 1.0
    kernel = kernel / kernel.sum()
    return kernel.astype(np.float32)


def _disk_blur_kernel(x_ref, o_ref, *, H, Wc, dx_groups, inv_n):
    """One grid step: disk conv of TC reflect-padded planes folded into lanes.

    x_ref : (1, Hp, TC*Wp)  padded planes, plane t occupies lanes [t*Wp, (t+1)*Wp)
    o_ref : (1, H,  Wc)     Wc = TC*Wp - 2r; plane t's valid output lives at
                            lanes [t*Wp, t*Wp + W) (tail lanes are don't-care)
    dx_groups: static tuple of (dx, (dy, ...)) for nonzero disk-kernel columns
    inv_n : 1 / number_of_nonzero_taps (all nonzero disk weights are equal)
    """
    # Single VMEM load + single f32 up-cast; all shifts below act on this
    # in-register value (lane/sublane relayouts on the XLU), not on the ref.
    x = x_ref[0].astype(jnp.float32)                     # (Hp, TC*Wp)

    partials = []
    for dx, dys in dx_groups:
        col = x[:, dx:dx + Wc]                           # one lane shift per dx
        part = col[dys[0]:dys[0] + H, :]                 # sublane-offset slices
        for dy in dys[1:]:
            part = part + col[dy:dy + H, :]
        partials.append(part)

    # Balanced pairwise tree over the per-dx partials (ILP for the 4 VALUs).
    while len(partials) > 1:
        nxt = [partials[i] + partials[i + 1]
               for i in range(0, len(partials) - 1, 2)]
        if len(partials) % 2:
            nxt.append(partials[-1])
        partials = nxt

    # Lane-dense store (Wc lanes wide), single scale at the end.
    o_ref[0] = (partials[0] * inv_n).astype(o_ref.dtype)


def _vmem_capacity_bytes() -> int:
    """Physical VMEM of the current part; conservative fallback (v7x = 64 MiB)."""
    try:
        return int(pltpu.get_tpu_info().vmem_capacity_bytes)
    except Exception:
        return 64 * 1024 * 1024


def _choose_packed_planes(n_planes, H, W, r, itemsize, vmem_budget) -> int:
    """How many planes (TC) to fold into the lane axis per grid step.

    Preference order: fits VMEM (double-buffered in+out blocks), fits the vreg
    working set (f32 slab + accumulator well under 256 KiB), lane-dense
    (TC*Wp >= 128), and among lane-dense choices the *smallest* TC so the grid
    keeps as many steps as possible (pipeline overlap, 2-TC v7x sharding).
    """
    Hp, Wp = H + 2 * r, W + 2 * r

    def io_bytes(tc):     # double-buffered input block + output block
        return 2 * itemsize * (Hp * tc * Wp + H * (tc * Wp - 2 * r))

    def vreg_bytes(tc):   # f32 loaded slab + f32 accumulator held in registers
        return 4 * (Hp * tc * Wp + H * (tc * Wp - 2 * r))

    divisors = [d for d in range(1, n_planes + 1) if n_planes % d == 0]
    feasible = [d for d in divisors if io_bytes(d) <= vmem_budget] or [1]
    capped = [d for d in feasible if vreg_bytes(d) <= 160 * 1024] or [min(feasible)]
    lane_dense = [d for d in capped if d * Wp >= 128]
    if lane_dense:
        return min(lane_dense)
    return max(capped)


def disk_blur(img: jax.Array, radius: int, p: float = 1.0) -> jax.Array:
    """Pallas implementation of DiskBlur.forward for NCHW (or CHW) inputs."""
    if not isinstance(radius, int) or radius <= 0:
        raise ValueError("Radius must be a positive integer.")
    if not isinstance(p, float) or not 0.0 <= p <= 1.0:
        raise ValueError("Probability p must be a float between 0.0 and 1.0.")
    # Host-side stochastic skip, same semantics as the PyTorch module
    # (random.random() is in [0, 1), so p == 1.0 always applies the blur).
    # NOTE: if wrapped in jax.jit this decision is frozen at trace time.
    if random.random() > p:
        return img
    if img.ndim < 3:
        raise ValueError("Expected input with at least 3 dims (C, H, W)")
    is_batch = img.ndim == 4
    if not is_batch:
        img = img[None]

    B, C, H, W = img.shape
    r = radius
    if r >= H or r >= W:
        raise ValueError("radius must be smaller than both spatial dims for "
                         "reflection padding")
    Hp, Wp = H + 2 * r, W + 2 * r
    N = B * C

    disk = _create_disk_kernel(r)
    nz = disk > 0.0
    n_taps = int(nz.sum())
    inv_n = 1.0 / n_taps  # every nonzero entry equals 1/n_taps -> sum then scale
    dx_groups = tuple(
        (dx, tuple(int(dy) for dy in range(disk.shape[0]) if nz[dy, dx]))
        for dx in range(disk.shape[1])
        if nz[:, dx].any()
    )

    vmem_cap = _vmem_capacity_bytes()
    vmem_budget = vmem_cap // 2            # 64 MiB on 128 MiB parts, 32 MiB on v7x
    vmem_limit = (vmem_cap * 3) // 4       # 96 MiB on 128 MiB parts, 48 MiB on v7x

    itemsize = jnp.dtype(img.dtype).itemsize
    TC = _choose_packed_planes(N, H, W, r, itemsize, vmem_budget)
    Ng = N // TC
    TCWp = TC * Wp
    Wc = TCWp - 2 * r

    # --- host-side repack (single XLA copy): reflect-pad each plane and fold
    # --- TC padded plane widths into the lane axis -> lane-dense kernel blocks.
    x = img.reshape(N, H, W)
    xp = jnp.pad(x, ((0, 0), (r, r), (r, r)), mode="reflect")          # (N, Hp, Wp)
    xp = xp.reshape(Ng, TC, Hp, Wp).transpose(0, 2, 1, 3).reshape(Ng, Hp, TCWp)

    kernel_fn = functools.partial(
        _disk_blur_kernel, H=H, Wc=Wc, dx_groups=dx_groups, inv_n=inv_n)

    out = pl.pallas_call(
        kernel_fn,
        out_shape=jax.ShapeDtypeStruct((Ng, H, Wc), img.dtype),
        grid_spec=pltpu.PrefetchScalarGridSpec(
            num_scalar_prefetch=0,
            grid=(Ng,),
            in_specs=[pl.BlockSpec((1, Hp, TCWp), lambda i: (i, 0, 0))],
            out_specs=pl.BlockSpec((1, H, Wc), lambda i: (i, 0, 0)),
        ),
        compiler_params=pltpu.CompilerParams(
            dimension_semantics=("parallel",),
            vmem_limit_bytes=int(vmem_limit),
        ),
    )(xp)

    # --- unpack: take each plane's valid W columns out of its Wp-wide lane slab.
    cols = (np.arange(TC)[:, None] * Wp + np.arange(W)[None, :]).reshape(-1)
    out = jnp.take(out, jnp.asarray(cols), axis=2)                     # (Ng, H, TC*W)
    out = out.reshape(Ng, H, TC, W).transpose(0, 2, 1, 3).reshape(B, C, H, W)
    if not is_batch:
        out = out[0]
    return out


def _reference_disk_blur(img: jax.Array, radius: int) -> jax.Array:
    """Plain-JAX reference (reflect pad + depthwise weighted disk conv)."""
    B, C, H, W = img.shape
    r = radius
    disk = jnp.asarray(_create_disk_kernel(r))
    xp = jnp.pad(img, ((0, 0), (0, 0), (r, r), (r, r)), mode="reflect")
    acc = jnp.zeros((B, C, H, W), jnp.float32)
    K = 2 * r + 1
    for dy in range(K):
        for dx in range(K):
            acc = acc + disk[dy, dx] * xp[:, :, dy:dy + H, dx:dx + W].astype(jnp.float32)
    return acc.astype(img.dtype)


if __name__ == "__main__":
    key = jax.random.PRNGKey(0)
    B, C, H, W = 2, 4, 16, 16
    radius = 2

    x = jax.random.uniform(key, (B, C, H, W), dtype=jnp.float32)

    y = disk_blur(x, radius=radius, p=1.0)
    y = jax.block_until_ready(y)

    y_ref = jax.block_until_ready(_reference_disk_blur(x, radius))
    np.testing.assert_allclose(np.asarray(y), np.asarray(y_ref), rtol=1e-5, atol=1e-5)

    assert y.shape == (B, C, H, W)
    assert y.dtype == x.dtype
    print("KERNEL_OK")
</pallas_src>

<mosaic_0001>
module attributes {stable_mosaic.version = 11 : i64} {
  func.func @_disk_blur_kernel(%arg0: i32, %arg1: memref<1x20x160xf32, #tpu.memory_space<vmem>>, %arg2: memref<1x16x156xf32, #tpu.memory_space<vmem>>) attributes {dimension_semantics = [#tpu.dimension_semantics<parallel>], iteration_bounds = array<i64: 1>, scalar_prefetch = 0 : i64, scratch_operands = 0 : i64, tpu.core_type = #tpu.core_type<tc>, window_params = [{transform_indices = @transform_0, window_bounds = array<i64: 1, 20, 160>}, {transform_indices = @transform_1, window_bounds = array<i64: 1, 16, 156>}]} {
    %c0 = arith.constant 0 : index
    %c0_0 = arith.constant 0 : index
    %c0_1 = arith.constant 0 : index
    %0 = vector.load %arg1[%c0, %c0_0, %c0_1] : memref<1x20x160xf32, #tpu.memory_space<vmem>>, vector<1x20x160xf32>
    %1 = vector.shape_cast %0 : vector<1x20x160xf32> to vector<20x160xf32>
    %2 = vector.extract_strided_slice %1 {offsets = [0, 0], sizes = [20, 156], strides = [1, 1]} : vector<20x160xf32> to vector<20x156xf32>
    %3 = vector.extract_strided_slice %2 {offsets = [2, 0], sizes = [16, 156], strides = [1, 1]} : vector<20x156xf32> to vector<16x156xf32>
    %4 = vector.extract_strided_slice %1 {offsets = [0, 1], sizes = [20, 156], strides = [1, 1]} : vector<20x160xf32> to vector<20x156xf32>
    %5 = vector.extract_strided_slice %4 {offsets = [1, 0], sizes = [16, 156], strides = [1, 1]} : vector<20x156xf32> to vector<16x156xf32>
    %6 = vector.extract_strided_slice %4 {offsets = [2, 0], sizes = [16, 156], strides = [1, 1]} : vector<20x156xf32> to vector<16x156xf32>
    %7 = arith.addf %5, %6 : vector<16x156xf32>
    %8 = vector.extract_strided_slice %4 {offsets = [3, 0], sizes = [16, 156], strides = [1, 1]} : vector<20x156xf32> to vector<16x156xf32>
    %9 = arith.addf %7, %8 : vector<16x156xf32>
    %10 = vector.extract_strided_slice %1 {offsets = [0, 2], sizes = [20, 156], strides = [1, 1]} : vector<20x160xf32> to vector<20x156xf32>
    %11 = vector.extract_strided_slice %10 {offsets = [0, 0], sizes = [16, 156], strides = [1, 1]} : vector<20x156xf32> to vector<16x156xf32>
    %12 = vector.extract_strided_slice %10 {offsets = [1, 0], sizes = [16, 156], strides = [1, 1]} : vector<20x156xf32> to vector<16x156xf32>
    %13 = arith.addf %11, %12 : vector<16x156xf32>
    %14 = vector.extract_strided_slice %10 {offsets = [2, 0], sizes = [16, 156], strides = [1, 1]} : vector<20x156xf32> to vector<16x156xf32>
    %15 = arith.addf %13, %14 : vector<16x156xf32>
    %16 = vector.extract_strided_slice %10 {offsets = [3, 0], sizes = [16, 156], strides = [1, 1]} : vector<20x156xf32> to vector<16x156xf32>
    %17 = arith.addf %15, %16 : vector<16x156xf32>
    %18 = vector.extract_strided_slice %10 {offsets = [4, 0], sizes = [16, 156], strides = [1, 1]} : vector<20x156xf32> to vector<16x156xf32>
    %19 = arith.addf %17, %18 : vector<16x156xf32>
    %20 = vector.extract_strided_slice %1 {offsets = [0, 3], sizes = [20, 156], strides = [1, 1]} : vector<20x160xf32> to vector<20x156xf32>
    %21 = vector.extract_strided_slice %20 {offsets = [1, 0], sizes = [16, 156], strides = [1, 1]} : vector<20x156xf32> to vector<16x156xf32>
    %22 = vector.extract_strided_slice %20 {offsets = [2, 0], sizes = [16, 156], strides = [1, 1]} : vector<20x156xf32> to vector<16x156xf32>
    %23 = arith.addf %21, %22 : vector<16x156xf32>
    %24 = vector.extract_strided_slice %20 {offsets = [3, 0], sizes = [16, 156], strides = [1, 1]} : vector<20x156xf32> to vector<16x156xf32>
    %25 = arith.addf %23, %24 : vector<16x156xf32>
    %26 = vector.extract_strided_slice %1 {offsets = [0, 4], sizes = [20, 156], strides = [1, 1]} : vector<20x160xf32> to vector<20x156xf32>
    %27 = vector.extract_strided_slice %26 {offsets = [2, 0], sizes = [16, 156], strides = [1, 1]} : vector<20x156xf32> to vector<16x156xf32>
    %28 = arith.addf %3, %9 : vector<16x156xf32>
    %29 = arith.addf %19, %25 : vector<16x156xf32>
    %30 = arith.addf %28, %29 : vector<16x156xf32>
    %31 = arith.addf %30, %27 : vector<16x156xf32>
    %cst = arith.constant 0.0769230798 : f32
    %32 = vector.broadcast %cst : f32 to vector<16x156xf32>
    %33 = arith.mulf %31, %32 : vector<16x156xf32>
    %c0_2 = arith.constant 0 : index
    %c0_3 = arith.constant 0 : index
    %c0_4 = arith.constant 0 : index
    %34 = vector.load %arg2[%c0_2, %c0_3, %c0_4] : memref<1x16x156xf32, #tpu.memory_space<vmem>>, vector<1x16x156xf32>
    %35 = vector.shape_cast %34 : vector<1x16x156xf32> to vector<16x156xf32>
    %36 = vector.shape_cast %33 : vector<16x156xf32> to vector<1x16x156xf32>
    tpu.vector_store %arg2[%c0_2, %c0_3, %c0_4], %36 {strides = array<i32>} : memref<1x16x156xf32, #tpu.memory_space<vmem>>, vector<1x16x156xf32>,
    return
  }
  func.func @transform_0(%arg0: i32) -> (i32, i32, i32) {
    %c0_i32 = arith.constant 0 : i32
    %c0_i32_0 = arith.constant 0 : i32
    %c0_i32_1 = arith.constant 0 : i32
    return %arg0, %c0_i32, %c0_i32_0 : i32, i32, i32
  }
  func.func @transform_1(%arg0: i32) -> (i32, i32, i32) {
    %c0_i32 = arith.constant 0 : i32
    %c0_i32_0 = arith.constant 0 : i32
    %c0_i32_1 = arith.constant 0 : i32
    return %arg0, %c0_i32, %c0_i32_0 : i32, i32, i32
  }
}

</mosaic_0001>

<llo_original>
// kernel: tpu_custom_call.1
$region0: #{tpu_custom_call.1}
  #allocation0 [shape = 'u32[]', space=smem, size = 0x4, offset = 0x4, fixed_abs, tag = 'smem constant byte address 0x4 - core index']
  #allocation1 [shape = 'u32[144,128]{1,0:T(1,128)}', space=vmem, size = 0x12000, scoped, tag = 'internal scratch']
  %s0 = inlined_call_operand.vmem [shape: f32[1,20,160], index: 0, kind: input, shape index: {}]
  %s1 = inlined_call_operand.hbm [shape: f32[1,16,156], index: 1, kind: output, shape index: {}]
  %s2 = sld [smem:[#allocation0]]
  $region14: #{tpu_custom_call.1} parent=0
    _
  %s4 = ssub.s32 1, %s2
  %s5 = scalar_select 0, %s4, %s2
  $region1: #{tpu_custom_call.1} parent=0
    #allocation2 [shape = 'u8[16384]{0}', space=vmem, size = 0x4000, scoped, tag = 'output window, operand 0, single buffered']
    #allocation3 [shape = 's32[1]{0}', space=sflag, size = 0x4, scoped, tag = 'scoped memory for tpu_custom_call.1']
    %6 = vsyncpa [#allocation3], 0
    // Predicated region
    $region2: #{tpu_custom_call.1} parent=1 // pred_check
      _
    $region3: #{tpu_custom_call.1} parent=1 // pred_check_branch
      %8 = sbr.rel (0) target = $region5
    $region4: #{tpu_custom_call.1} parent=1 // pred_region
      _
    $region5: #{tpu_custom_call.1} parent=1 // pred_fallthru
      _
    %v9 = vld [vmem:[%s0] sm:$0xff]
    %v10 = vld [vmem:[%s0 + $0x8] sm:$0xff]
    %v11 = vld [vmem:[%s0 + $0x10] sm:$0xff]
    %v12 = vld [vmem:[%s0 + $0x18] sm:$0xff]
    %v13 = vld [vmem:[%s0 + $0x20] sm:$0xf]
    %v14 = vld [vmem:[%s0 + $0x28] sm:$0xf]
    %vm21 = vcmask 1046528
    %v22 = vrot.slane %v9, 1
    %v23 = vrot.slane %v11, 1
    %v24 = vsel %vm21, %v22, %v23
    %v25 = vrot.slane %v10, 1
    %v26 = vrot.slane %v12, 1
    %v27 = vsel %vm21, %v25, %v26
    %v28 = vrot.slane %v13, 1
    %v29 = vsel %vm21, %v23, %v28
    %v30 = vrot.slane %v14, 1
    %v31 = vsel %vm21, %v26, %v30
    %v38 = vadd.f32 %v9, %v24
    %v39 = vadd.f32 %v10, %v27
    %v40 = vadd.f32 %v11, %v29
    %v41 = vadd.f32 %v12, %v31
    %v42 = vadd.f32 %v13, %v28
    %v43 = vadd.f32 %v14, %v30
    %vm44 = vcmask 1045504
    %v45 = vrot.slane %v9, 2
    %v46 = vrot.slane %v11, 2
    %v47 = vsel %vm44, %v45, %v46
    %v48 = vrot.slane %v10, 2
    %v49 = vrot.slane %v12, 2
    %v50 = vsel %vm44, %v48, %v49
    %v51 = vrot.slane %v13, 2
    %v52 = vsel %vm44, %v46, %v51
    %v53 = vrot.slane %v14, 2
    %v54 = vsel %vm44, %v49, %v53
    %v61 = vadd.f32 %v38, %v47
    %v62 = vadd.f32 %v39, %v50
    %v63 = vadd.f32 %v40, %v52
    %v64 = vadd.f32 %v41, %v54
    %v65 = vadd.f32 %v42, %v51
    %v66 = vadd.f32 %v43, %v53
    %vm67 = vcmask 1044480
    %v68 = vrot.slane %v9, 3
    %v69 = vrot.slane %v11, 3
    %v70 = vsel %vm67, %v68, %v69
    %v71 = vrot.slane %v10, 3
    %v72 = vrot.slane %v12, 3
    %v73 = vsel %vm67, %v71, %v72
    %v74 = vrot.slane %v13, 3
    %v75 = vsel %vm67, %v69, %v74
    %v76 = vrot.slane %v14, 3
    %v77 = vsel %vm67, %v72, %v76
    %v82 = vadd.f32 %v61, %v70
    %v83 = vadd.f32 %v62, %v73
    %v84 = vadd.f32 %v63, %v75
    %v85 = vadd.f32 %v64, %v77
    %vm86 = vcmask 1043456
    %v87 = vrot.slane %v9, 4
    %v88 = vrot.slane %v11, 4
    %v89 = vsel %vm86, %v87, %v88
    %v90 = vrot.slane %v10, 4
    %v91 = vrot.slane %v12, 4
    %v92 = vsel %vm86, %v90, %v91
    %v93 = vrot.slane %v13, 4
    %v94 = vsel %vm86, %v88, %v93
    %v95 = vrot.slane %v14, 4
    %v96 = vsel %vm86, %v91, %v95
    %v101 = vadd.f32 %v82, %v89
    %v102 = vadd.f32 %v83, %v92
    %v103 = vadd.f32 %v84, %v94
    %v104 = vadd.f32 %v85, %v96
    %vm111 = vcmask 1040384
    %v112 = vrot.slane %v61, 7
    %v113 = vrot.slane %v62, 7
    %v114 = vrot.slane %v63, 7
    %v115 = vsel %vm111, %v112, %v114
    %v116 = vrot.slane %v64, 7
    %v117 = vsel %vm111, %v113, %v116
    %v118 = vrot.slane %v65, 7
    %v119 = vsel %vm111, %v114, %v118
    %v120 = vrot.slane %v66, 7
    %v121 = vsel %vm111, %v116, %v120
    %122 = vrot.lane.b32.xlu0 %v112, 127
    %v123 = vpop.permute.xlu0 %122
    %124 = vrot.lane.b32.xlu0 %v113, 127
    %v125 = vpop.permute.xlu0 %124
    %126 = vrot.lane.b32.xlu0 %v115, 127
    %v127 = vpop.permute.xlu0 %126
    %128 = vrot.lane.b32.xlu0 %v117, 127
    %v129 = vpop.permute.xlu0 %128
    %130 = vrot.lane.b32.xlu0 %v119, 127
    %v131 = vpop.permute.xlu0 %130
    %132 = vrot.lane.b32.xlu0 %v121, 127
    %v133 = vpop.permute.xlu0 %132
    %vm134 = vcmask 1039360
    %v135 = vsel %vm134, %v123, %v125
    %v136 = vsel %vm134, %v127, %v129
    %v137 = vsel %vm134, %v131, %v133
    %v144 = vadd.f32 %v9, %v135
    %v145 = vadd.f32 %v10, %v125
    %v146 = vadd.f32 %v11, %v136
    %v147 = vadd.f32 %v12, %v129
    %v148 = vadd.f32 %v13, %v137
    %v149 = vadd.f32 %v14, %v133
    %v150 = vrot.slane %v61, 1
    %v151 = vrot.slane %v63, 1
    %v152 = vsel %vm21, %v150, %v151
    %v153 = vrot.slane %v62, 1
    %v154 = vrot.slane %v64, 1
    %v155 = vsel %vm21, %v153, %v154
    %v156 = vrot.slane %v65, 1
    %v157 = vsel %vm21, %v151, %v156
    %v158 = vrot.slane %v66, 1
    %v159 = vsel %vm21, %v154, %v158
    %160 = vrot.lane.b32.xlu0 %v152, 127
    %v161 = vpop.permute.xlu0 %160
    %162 = vrot.lane.b32.xlu0 %v155, 127
    %v163 = vpop.permute.xlu0 %162
    %164 = vrot.lane.b32.xlu0 %v157, 127
    %v165 = vpop.permute.xlu0 %164
    %166 = vrot.lane.b32.xlu0 %v159, 127
    %v167 = vpop.permute.xlu0 %166
    %v168 = vsel %vm134, %v161, %v163
    %v169 = vsel %vm134, %v165, %v167
    %v174 = vadd.f32 %v101, %v168
    %v175 = vadd.f32 %v102, %v163
    %v176 = vadd.f32 %v103, %v169
    %v177 = vadd.f32 %v104, %v167
    %vm182 = vcmask 1041408
    %v183 = vrot.slane %v174, 6
    %v184 = vrot.slane %v175, 6
    %v185 = vrot.slane %v176, 6
    %v186 = vsel %vm182, %v183, %v185
    %v187 = vrot.slane %v177, 6
    %v188 = vsel %vm182, %v184, %v187
    %189 = vrot.lane.b32.xlu0 %v183, 126
    %v190 = vpop.permute.xlu0 %189
    %191 = vrot.lane.b32.xlu0 %v184, 126
    %v192 = vpop.permute.xlu0 %191
    %193 = vrot.lane.b32.xlu0 %v186, 126
    %v194 = vpop.permute.xlu0 %193
    %195 = vrot.lane.b32.xlu0 %v188, 126
    %v196 = vpop.permute.xlu0 %195
    %197 = vrot.lane.b32.xlu0 %v185, 126
    %v198 = vpop.permute.xlu0 %197
    %199 = vrot.lane.b32.xlu0 %v187, 126
    %v200 = vpop.permute.xlu0 %199
    %vm201 = vcmask 1031168
    %v202 = vsel %vm201, %v190, %v192
    %v203 = vsel %vm201, %v194, %v196
    %v204 = vsel %vm201, %v198, %v200
    %v211 = vadd.f32 %v144, %v202
    %v212 = vadd.f32 %v145, %v192
    %v213 = vadd.f32 %v146, %v203
    %v214 = vadd.f32 %v147, %v196
    %v215 = vadd.f32 %v148, %v204
    %v216 = vadd.f32 %v149, %v200
    %217 = vrot.lane.b32.xlu0 %v9, 124
    %v218 = vpop.permute.xlu0 %217
    %219 = vrot.lane.b32.xlu0 %v10, 124
    %v220 = vpop.permute.xlu0 %219
    %221 = vrot.lane.b32.xlu0 %v11, 124
    %v222 = vpop.permute.xlu0 %221
    %223 = vrot.lane.b32.xlu0 %v12, 124
    %v224 = vpop.permute.xlu0 %223
    %225 = vrot.lane.b32.xlu0 %v13, 124
    %v226 = vpop.permute.xlu0 %225
    %227 = vrot.lane.b32.xlu0 %v14, 124
    %v228 = vpop.permute.xlu0 %227
    %vm229 = vcmask 1014784
    %v230 = vsel %vm229, %v218, %v220
    %v231 = vsel %vm229, %v222, %v224
    %v232 = vsel %vm229, %v226, %v228
    %v239 = vadd.f32 %v211, %v230
    %v240 = vadd.f32 %v212, %v220
    %v241 = vadd.f32 %v213, %v231
    %v242 = vadd.f32 %v214, %v224
    %v243 = vadd.f32 %v215, %v232
    %v244 = vadd.f32 %v216, %v228
    %v245 = vmul.f32 %v239, 0.07692308
    %v246 = vmul.f32 %v240, 0.07692308
    %v247 = vmul.f32 %v241, 0.07692308
    %v248 = vmul.f32 %v242, 0.07692308
    %v249 = vmul.f32 %v243, 0.07692308
    %v250 = vmul.f32 %v244, 0.07692308
    %v257 = vrot.slane %v245, 2
    %v258 = vrot.slane %v247, 2
    %v259 = vsel %vm44, %v257, %v258
    %v260 = vrot.slane %v246, 2
    %v261 = vrot.slane %v248, 2
    %v262 = vsel %vm44, %v260, %v261
    %v263 = vrot.slane %v249, 2
    %v264 = vsel %vm44, %v258, %v263
    %v265 = vrot.slane %v250, 2
    %v266 = vsel %vm44, %v261, %v265
    %271 = vst [vmem:[#allocation2] sm:$0xff] %v259
    %vm272 = vcmask 228352
    %273 = vst.msk [vmem:[#allocation2 + $0x8] sm:$0xff] %vm272, %v262
    %274 = vst [vmem:[#allocation2 + $0x10] sm:$0xff] %v264
    %275 = vst.msk [vmem:[#allocation2 + $0x18] sm:$0xff] %vm272, %v266
    // Predicated region
    $region6: #{tpu_custom_call.1} parent=1 // pred_check
      _
    $region7: #{tpu_custom_call.1} parent=1 // pred_check_branch
      %277 = sbr.rel (0) target = $region9
    $region8: #{tpu_custom_call.1} parent=1 // pred_region
      %s279 = ssub.s32 512, 512
      %280 = vsyncadd [#allocation3], %s279
      %s281 = sshll.u32 [#allocation2], 4
      %s282 = int_to_ptr.vmem [resolvable:$true] %s281
      %287 = dma.vmem_to_hbm [thread:$0]  %s282, 512, %s1, [#allocation3], 256, 256, 16
    $region9: #{tpu_custom_call.1} parent=1 // pred_fallthru
      _
    // Predicated region
    $region10: #{tpu_custom_call.1} parent=1 // pred_check
      _
    $region11: #{tpu_custom_call.1} parent=1 // pred_check_branch
      %289 = sbr.rel (0) target = $region13
    $region12: #{tpu_custom_call.1} parent=1 // pred_region
      %290 = dma.done [#allocation3], 512
    $region13: #{tpu_custom_call.1} parent=1 // pred_fallthru
      _
    %291 = vsyncpa [#allocation3], 1

</llo_original>
